<compile_context>
chip_gen: v6e
topology: v6e:2x2x1
jax: 0.10.0
libtpu: 0.0.40
codegen_flags: <defaults>
</compile_context>

<pallas_src>
import jax
import jax.numpy as jnp
from jax.experimental import pallas as pl
from jax.experimental.pallas import tpu as pltpu

K = 5          # conv kernel size
PAD = 2        # "same" padding
C_IN, C1, C2, C3 = 2, 16, 32, 64


def _conv1d_relu_gemm(h, w, b):
    """h: (B, L, Cin) f32, w: (K*Cin, Cout), b: (1, Cout) f32.
    Returns ReLU(conv1d_same(h) + b) as a single im2col GEMM -> (B, L, Cout) f32."""
    B, L, Cin = h.shape
    Cout = w.shape[-1]
    zpad = jnp.zeros((B, PAD, Cin), dtype=h.dtype)
    hp = jnp.concatenate([zpad, h, zpad], axis=1)                          # (B, L+4, Cin)
    # One loaded value -> 5 shifted windows, concatenated along the channel (lane) axis.
    win = jnp.concatenate([hp[:, k:k + L, :] for k in range(K)], axis=-1)  # (B, L, K*Cin)
    win2d = win.reshape(B * L, K * Cin).astype(w.dtype)                    # fold batch into GEMM M
    acc = jnp.dot(win2d, w, preferred_element_type=jnp.float32)            # (B*L, Cout) f32
    out = jnp.maximum(acc + b, 0.0)                                        # bias + ReLU in f32
    return out.reshape(B, L, Cout)


def encoding_cnn_kernel(x_ref, w1_ref, b1_ref, w2_ref, b2_ref, w3_ref, b3_ref, o_ref):
    # x_ref: (B_TILE, L, 2) f32; o_ref: (B_TILE, L, 64) f32
    x = x_ref[...]
    h1 = _conv1d_relu_gemm(x, w1_ref[...], b1_ref[...])
    h2 = _conv1d_relu_gemm(h1, w2_ref[...], b2_ref[...])
    h3 = _conv1d_relu_gemm(h2, w3_ref[...], b3_ref[...])
    o_ref[...] = h3.astype(o_ref.dtype)


def encoding_cnn(x_ncl, params, *, compute_dtype=jnp.float32, block_b=None):
    """x_ncl: (N, 2, L) -> (N, L, 64) f32 (matches PyTorch EncodingCNN forward)."""
    w1, b1, w2, b2, w3, b3 = params
    N, Cin, L = x_ncl.shape
    assert Cin == C_IN

    if block_b is None:
        block_b = min(N, 8)
    n_blocks = pl.cdiv(N, block_b)
    Np = n_blocks * block_b

    x_nlc = jnp.transpose(x_ncl, (0, 2, 1)).astype(jnp.float32)            # NCL -> NLC
    if Np != N:
        x_nlc = jnp.pad(x_nlc, ((0, Np - N), (0, 0), (0, 0)))

    # PyTorch Conv1d weight (Cout, Cin, K) -> im2col layout (K*Cin, Cout),
    # row ordering (k, cin) matching the tap concatenation above.
    def prep_w(w):
        cout = w.shape[0]
        return jnp.transpose(w, (2, 1, 0)).reshape(-1, cout).astype(compute_dtype)

    w1_t, w2_t, w3_t = prep_w(w1), prep_w(w2), prep_w(w3)
    b1_r = b1.reshape(1, C1).astype(jnp.float32)
    b2_r = b2.reshape(1, C2).astype(jnp.float32)
    b3_r = b3.reshape(1, C3).astype(jnp.float32)

    full2d = lambda arr: pl.BlockSpec(arr.shape, lambda b: (0, 0))

    # TODO(synk): for very large L (v7x 64 MiB VMEM / v5e 16 MiB scoped default),
    # tile the length axis with a 6-row halo and zero-masked recompute of the
    # intermediate pad rows; not needed at these sizes.
    out = pl.pallas_call(
        encoding_cnn_kernel,
        out_shape=jax.ShapeDtypeStruct((Np, L, C3), jnp.float32),
        grid_spec=pltpu.PrefetchScalarGridSpec(
            num_scalar_prefetch=0,
            grid=(n_blocks,),
            in_specs=[
                pl.BlockSpec((block_b, L, C_IN), lambda b: (b, 0, 0)),
                full2d(w1_t), full2d(b1_r),
                full2d(w2_t), full2d(b2_r),
                full2d(w3_t), full2d(b3_r),
            ],
            out_specs=pl.BlockSpec((block_b, L, C3), lambda b: (b, 0, 0)),
        ),
        compiler_params=pltpu.CompilerParams(
            dimension_semantics=("parallel",)),
    )(x_nlc, w1_t, b1_r, w2_t, b2_r, w3_t, b3_r)

    return out[:N] if Np != N else out


def _reference(x_ncl, params):
    """Pure-JAX reference (tap-sum formulation, f32) for correctness checks."""
    w1, b1, w2, b2, w3, b3 = params

    def conv_relu(x_nlc, w, b):
        N, L, _ = x_nlc.shape
        xp = jnp.pad(x_nlc, ((0, 0), (PAD, PAD), (0, 0)))
        wt = jnp.transpose(w, (2, 1, 0))            # (K, Cin, Cout)
        acc = sum(jnp.einsum('nlc,cd->nld', xp[:, k:k + L, :], wt[k])
                  for k in range(K))
        return jnp.maximum(acc + b, 0.0)

    h = jnp.transpose(x_ncl, (0, 2, 1))
    h = conv_relu(h, w1, b1)
    h = conv_relu(h, w2, b2)
    h = conv_relu(h, w3, b3)
    return h


def init_params(key):
    """Deterministic parameter init (PyTorch Conv1d shapes: (Cout, Cin, K))."""
    ks = jax.random.split(key, 6)

    def conv_init(kw, kb, cout, cin):
        bound = 1.0 / jnp.sqrt(cin * K)
        w = jax.random.uniform(kw, (cout, cin, K), jnp.float32, -bound, bound)
        b = jax.random.uniform(kb, (cout,), jnp.float32, -bound, bound)
        return w, b

    w1, b1 = conv_init(ks[0], ks[1], C1, C_IN)
    w2, b2 = conv_init(ks[2], ks[3], C2, C1)
    w3, b3 = conv_init(ks[4], ks[5], C3, C2)
    return (w1, b1, w2, b2, w3, b3)


if __name__ == "__main__":
    key = jax.random.PRNGKey(0)
    pkey, xkey = jax.random.split(key)
    params = init_params(pkey)

    N, L = 2, 16
    x = jax.random.normal(xkey, (N, C_IN, L), dtype=jnp.float32)   # NCL like PyTorch

    ref = _reference(x, params)

    # f32 path (exact semantics)
    out = jax.block_until_ready(encoding_cnn(x, params))
    assert out.shape == (N, L, C3), out.shape
    assert jnp.allclose(out, ref, atol=1e-4, rtol=1e-4), "f32 mismatch vs reference"

    # bf16 compute path for v6e/v7x MXUs (loose numerical check).
    out_bf16 = jax.block_until_ready(
        encoding_cnn(x, params, compute_dtype=jnp.bfloat16))
    assert out_bf16.shape == (N, L, C3), out_bf16.shape
    assert float(jnp.max(jnp.abs(out_bf16 - ref))) < 0.1, "bf16 path diverged"

    print("KERNEL_OK")
</pallas_src>

<mosaic_0001>
module attributes {stable_mosaic.version = 11 : i64} {
  func.func @encoding_cnn_kernel(%arg0: i32, %arg1: memref<2x16x2xf32, #tpu.memory_space<vmem>>, %arg2: memref<10x16xf32, #tpu.memory_space<vmem>>, %arg3: memref<1x16xf32, #tpu.memory_space<vmem>>, %arg4: memref<80x32xf32, #tpu.memory_space<vmem>>, %arg5: memref<1x32xf32, #tpu.memory_space<vmem>>, %arg6: memref<160x64xf32, #tpu.memory_space<vmem>>, %arg7: memref<1x64xf32, #tpu.memory_space<vmem>>, %arg8: memref<2x16x64xf32, #tpu.memory_space<vmem>>) attributes {dimension_semantics = [#tpu.dimension_semantics<parallel>], iteration_bounds = array<i64: 1>, scalar_prefetch = 0 : i64, scratch_operands = 0 : i64, tpu.core_type = #tpu.core_type<tc>, window_params = [{transform_indices = @transform_0, window_bounds = array<i64: 2, 16, 2>}, {pipeline_mode = #tpu.pipeline_mode<synchronous>, transform_indices = @transform_1, window_bounds = array<i64: 10, 16>}, {pipeline_mode = #tpu.pipeline_mode<synchronous>, transform_indices = @transform_2, window_bounds = array<i64: 1, 16>}, {pipeline_mode = #tpu.pipeline_mode<synchronous>, transform_indices = @transform_3, window_bounds = array<i64: 80, 32>}, {pipeline_mode = #tpu.pipeline_mode<synchronous>, transform_indices = @transform_4, window_bounds = array<i64: 1, 32>}, {pipeline_mode = #tpu.pipeline_mode<synchronous>, transform_indices = @transform_5, window_bounds = array<i64: 160, 64>}, {pipeline_mode = #tpu.pipeline_mode<synchronous>, transform_indices = @transform_6, window_bounds = array<i64: 1, 64>}, {transform_indices = @transform_7, window_bounds = array<i64: 2, 16, 64>}]} {
    %c0 = arith.constant 0 : index
    %c0_0 = arith.constant 0 : index
    %c0_1 = arith.constant 0 : index
    %0 = vector.load %arg1[%c0, %c0_0, %c0_1] : memref<2x16x2xf32, #tpu.memory_space<vmem>>, vector<2x16x2xf32>
    %c0_2 = arith.constant 0 : index
    %c0_3 = arith.constant 0 : index
    %1 = vector.load %arg2[%c0_2, %c0_3] : memref<10x16xf32, #tpu.memory_space<vmem>>, vector<10x16xf32>
    %c0_4 = arith.constant 0 : index
    %c0_5 = arith.constant 0 : index
    %2 = vector.load %arg3[%c0_4, %c0_5] : memref<1x16xf32, #tpu.memory_space<vmem>>, vector<1x16xf32>
    %cst = arith.constant 0.000000e+00 : f32
    %3 = vector.broadcast %cst : f32 to vector<2x2x2xf32>
    %4 = tpu.concatenate %3, %0, %3 in 1 : vector<2x2x2xf32>, vector<2x16x2xf32>, vector<2x2x2xf32> -> vector<2x20x2xf32>
    %5 = vector.extract_strided_slice %4 {offsets = [0, 0, 0], sizes = [2, 16, 2], strides = [1, 1, 1]} : vector<2x20x2xf32> to vector<2x16x2xf32>
    %6 = vector.extract_strided_slice %4 {offsets = [0, 1, 0], sizes = [2, 16, 2], strides = [1, 1, 1]} : vector<2x20x2xf32> to vector<2x16x2xf32>
    %7 = vector.extract_strided_slice %4 {offsets = [0, 2, 0], sizes = [2, 16, 2], strides = [1, 1, 1]} : vector<2x20x2xf32> to vector<2x16x2xf32>
    %8 = vector.extract_strided_slice %4 {offsets = [0, 3, 0], sizes = [2, 16, 2], strides = [1, 1, 1]} : vector<2x20x2xf32> to vector<2x16x2xf32>
    %9 = vector.extract_strided_slice %4 {offsets = [0, 4, 0], sizes = [2, 16, 2], strides = [1, 1, 1]} : vector<2x20x2xf32> to vector<2x16x2xf32>
    %10 = tpu.concatenate %5, %6, %7, %8, %9 in 2 : vector<2x16x2xf32>, vector<2x16x2xf32>, vector<2x16x2xf32>, vector<2x16x2xf32>, vector<2x16x2xf32> -> vector<2x16x10xf32>
    %11 = vector.shape_cast %10 : vector<2x16x10xf32> to vector<32x10xf32>
    %cst_6 = arith.constant dense<0.000000e+00> : vector<32x16xf32>
    %12 = tpu.matmul %11, %1, %cst_6 {dimension_numbers = #tpu.dot_dimension_numbers<[1], [0], [0], [1], [0, 0, 1, 1], [], []>} : vector<32x10xf32>, vector<10x16xf32>, vector<32x16xf32> -> vector<32x16xf32>
    %13 = vector.broadcast %2 : vector<1x16xf32> to vector<32x16xf32>
    %14 = arith.addf %12, %13 : vector<32x16xf32>
    %cst_7 = arith.constant 0.000000e+00 : f32
    %15 = vector.broadcast %cst_7 : f32 to vector<32x16xf32>
    %16 = arith.maximumf %14, %15 : vector<32x16xf32>
    %17 = vector.shape_cast %16 : vector<32x16xf32> to vector<2x16x16xf32>
    %c0_8 = arith.constant 0 : index
    %c0_9 = arith.constant 0 : index
    %18 = vector.load %arg4[%c0_8, %c0_9] : memref<80x32xf32, #tpu.memory_space<vmem>>, vector<80x32xf32>
    %c0_10 = arith.constant 0 : index
    %c0_11 = arith.constant 0 : index
    %19 = vector.load %arg5[%c0_10, %c0_11] : memref<1x32xf32, #tpu.memory_space<vmem>>, vector<1x32xf32>
    %cst_12 = arith.constant 0.000000e+00 : f32
    %20 = vector.broadcast %cst_12 : f32 to vector<2x2x16xf32>
    %21 = tpu.concatenate %20, %17, %20 in 1 : vector<2x2x16xf32>, vector<2x16x16xf32>, vector<2x2x16xf32> -> vector<2x20x16xf32>
    %22 = vector.extract_strided_slice %21 {offsets = [0, 0, 0], sizes = [2, 16, 16], strides = [1, 1, 1]} : vector<2x20x16xf32> to vector<2x16x16xf32>
    %23 = vector.extract_strided_slice %21 {offsets = [0, 1, 0], sizes = [2, 16, 16], strides = [1, 1, 1]} : vector<2x20x16xf32> to vector<2x16x16xf32>
    %24 = vector.extract_strided_slice %21 {offsets = [0, 2, 0], sizes = [2, 16, 16], strides = [1, 1, 1]} : vector<2x20x16xf32> to vector<2x16x16xf32>
    %25 = vector.extract_strided_slice %21 {offsets = [0, 3, 0], sizes = [2, 16, 16], strides = [1, 1, 1]} : vector<2x20x16xf32> to vector<2x16x16xf32>
    %26 = vector.extract_strided_slice %21 {offsets = [0, 4, 0], sizes = [2, 16, 16], strides = [1, 1, 1]} : vector<2x20x16xf32> to vector<2x16x16xf32>
    %27 = tpu.concatenate %22, %23, %24, %25, %26 in 2 : vector<2x16x16xf32>, vector<2x16x16xf32>, vector<2x16x16xf32>, vector<2x16x16xf32>, vector<2x16x16xf32> -> vector<2x16x80xf32>
    %28 = vector.shape_cast %27 : vector<2x16x80xf32> to vector<32x80xf32>
    %cst_13 = arith.constant dense<0.000000e+00> : vector<32x32xf32>
    %29 = tpu.matmul %28, %18, %cst_13 {dimension_numbers = #tpu.dot_dimension_numbers<[1], [0], [0], [1], [0, 0, 1, 1], [], []>} : vector<32x80xf32>, vector<80x32xf32>, vector<32x32xf32> -> vector<32x32xf32>
    %30 = vector.broadcast %19 : vector<1x32xf32> to vector<32x32xf32>
    %31 = arith.addf %29, %30 : vector<32x32xf32>
    %cst_14 = arith.constant 0.000000e+00 : f32
    %32 = vector.broadcast %cst_14 : f32 to vector<32x32xf32>
    %33 = arith.maximumf %31, %32 : vector<32x32xf32>
    %34 = vector.shape_cast %33 : vector<32x32xf32> to vector<2x16x32xf32>
    %c0_15 = arith.constant 0 : index
    %c0_16 = arith.constant 0 : index
    %35 = vector.load %arg6[%c0_15, %c0_16] : memref<160x64xf32, #tpu.memory_space<vmem>>, vector<160x64xf32>
    %c0_17 = arith.constant 0 : index
    %c0_18 = arith.constant 0 : index
    %36 = vector.load %arg7[%c0_17, %c0_18] : memref<1x64xf32, #tpu.memory_space<vmem>>, vector<1x64xf32>
    %cst_19 = arith.constant 0.000000e+00 : f32
    %37 = vector.broadcast %cst_19 : f32 to vector<2x2x32xf32>
    %38 = tpu.concatenate %37, %34, %37 in 1 : vector<2x2x32xf32>, vector<2x16x32xf32>, vector<2x2x32xf32> -> vector<2x20x32xf32>
    %39 = vector.extract_strided_slice %38 {offsets = [0, 0, 0], sizes = [2, 16, 32], strides = [1, 1, 1]} : vector<2x20x32xf32> to vector<2x16x32xf32>
    %40 = vector.extract_strided_slice %38 {offsets = [0, 1, 0], sizes = [2, 16, 32], strides = [1, 1, 1]} : vector<2x20x32xf32> to vector<2x16x32xf32>
    %41 = vector.extract_strided_slice %38 {offsets = [0, 2, 0], sizes = [2, 16, 32], strides = [1, 1, 1]} : vector<2x20x32xf32> to vector<2x16x32xf32>
    %42 = vector.extract_strided_slice %38 {offsets = [0, 3, 0], sizes = [2, 16, 32], strides = [1, 1, 1]} : vector<2x20x32xf32> to vector<2x16x32xf32>
    %43 = vector.extract_strided_slice %38 {offsets = [0, 4, 0], sizes = [2, 16, 32], strides = [1, 1, 1]} : vector<2x20x32xf32> to vector<2x16x32xf32>
    %44 = tpu.concatenate %39, %40, %41, %42, %43 in 2 : vector<2x16x32xf32>, vector<2x16x32xf32>, vector<2x16x32xf32>, vector<2x16x32xf32>, vector<2x16x32xf32> -> vector<2x16x160xf32>
    %45 = vector.shape_cast %44 : vector<2x16x160xf32> to vector<32x160xf32>
    %cst_20 = arith.constant dense<0.000000e+00> : vector<32x64xf32>
    %46 = tpu.matmul %45, %35, %cst_20 {dimension_numbers = #tpu.dot_dimension_numbers<[1], [0], [0], [1], [0, 0, 1, 1], [], []>} : vector<32x160xf32>, vector<160x64xf32>, vector<32x64xf32> -> vector<32x64xf32>
    %47 = vector.broadcast %36 : vector<1x64xf32> to vector<32x64xf32>
    %48 = arith.addf %46, %47 : vector<32x64xf32>
    %cst_21 = arith.constant 0.000000e+00 : f32
    %49 = vector.broadcast %cst_21 : f32 to vector<32x64xf32>
    %50 = arith.maximumf %48, %49 : vector<32x64xf32>
    %51 = vector.shape_cast %50 : vector<32x64xf32> to vector<2x16x64xf32>
    %c0_22 = arith.constant 0 : index
    %c0_23 = arith.constant 0 : index
    %c0_24 = arith.constant 0 : index
    %52 = vector.load %arg8[%c0_22, %c0_23, %c0_24] : memref<2x16x64xf32, #tpu.memory_space<vmem>>, vector<2x16x64xf32>
    tpu.vector_store %arg8[%c0_22, %c0_23, %c0_24], %51 {strides = array<i32>} : memref<2x16x64xf32, #tpu.memory_space<vmem>>, vector<2x16x64xf32>,
    return
  }
  func.func @transform_0(%arg0: i32) -> (i32, i32, i32) {
    %c0_i32 = arith.constant 0 : i32
    %c0_i32_0 = arith.constant 0 : i32
    %c0_i32_1 = arith.constant 0 : i32
    return %arg0, %c0_i32, %c0_i32_0 : i32, i32, i32
  }
  func.func @transform_1(%arg0: i32) -> (i32, i32) {
    %c0_i32 = arith.constant 0 : i32
    %c0_i32_0 = arith.constant 0 : i32
    %c0_i32_1 = arith.constant 0 : i32
    return %c0_i32, %c0_i32_0 : i32, i32
  }
  func.func @transform_2(%arg0: i32) -> (i32, i32) {
    %c0_i32 = arith.constant 0 : i32
    %c0_i32_0 = arith.constant 0 : i32
    %c0_i32_1 = arith.constant 0 : i32
    return %c0_i32, %c0_i32_0 : i32, i32
  }
  func.func @transform_3(%arg0: i32) -> (i32, i32) {
    %c0_i32 = arith.constant 0 : i32
    %c0_i32_0 = arith.constant 0 : i32
    %c0_i32_1 = arith.constant 0 : i32
    return %c0_i32, %c0_i32_0 : i32, i32
  }
  func.func @transform_4(%arg0: i32) -> (i32, i32) {
    %c0_i32 = arith.constant 0 : i32
    %c0_i32_0 = arith.constant 0 : i32
    %c0_i32_1 = arith.constant 0 : i32
    return %c0_i32, %c0_i32_0 : i32, i32
  }
  func.func @transform_5(%arg0: i32) -> (i32, i32) {
    %c0_i32 = arith.constant 0 : i32
    %c0_i32_0 = arith.constant 0 : i32
    %c0_i32_1 = arith.constant 0 : i32
    return %c0_i32, %c0_i32_0 : i32, i32
  }
  func.func @transform_6(%arg0: i32) -> (i32, i32) {
    %c0_i32 = arith.constant 0 : i32
    %c0_i32_0 = arith.constant 0 : i32
    %c0_i32_1 = arith.constant 0 : i32
    return %c0_i32, %c0_i32_0 : i32, i32
  }
  func.func @transform_7(%arg0: i32) -> (i32, i32, i32) {
    %c0_i32 = arith.constant 0 : i32
    %c0_i32_0 = arith.constant 0 : i32
    %c0_i32_1 = arith.constant 0 : i32
    return %arg0, %c0_i32, %c0_i32_0 : i32, i32, i32
  }
}

</mosaic_0001>

<llo_original>
// kernel: tpu_custom_call.1
$region0: #{tpu_custom_call.1}
  #allocation0 [shape = 'u32[]', space=smem, size = 0x4, offset = 0x4, fixed_abs, tag = 'smem constant byte address 0x4 - core index']
  #allocation1 [shape = 'u32[144,128]{1,0:T(1,128)}', space=vmem, size = 0x12000, scoped, tag = 'internal scratch']
  %s0 = inlined_call_operand.vmem [shape: f32[2,16,2], index: 0, kind: input, shape index: {}]
  %s1 = inlined_call_operand.vmem [shape: f32[10,16], index: 1, kind: input, shape index: {}]
  %s2 = inlined_call_operand.vmem [shape: f32[1,16], index: 2, kind: input, shape index: {}]
  %s3 = inlined_call_operand.vmem [shape: f32[80,32], index: 3, kind: input, shape index: {}]
  %s4 = inlined_call_operand.vmem [shape: f32[1,32], index: 4, kind: input, shape index: {}]
  %s5 = inlined_call_operand.vmem [shape: f32[160,64], index: 5, kind: input, shape index: {}]
  %s6 = inlined_call_operand.vmem [shape: f32[1,64], index: 6, kind: input, shape index: {}]
  %s7 = inlined_call_operand.hbm [shape: f32[2,16,64], index: 7, kind: output, shape index: {}]
  %s8 = sld [smem:[#allocation0]]
  $region38: #{tpu_custom_call.1} parent=0
    _
  %s10 = ssub.s32 1, %s8
  %s11 = scalar_select 0, %s10, %s8
  $region1: #{tpu_custom_call.1} parent=0
    #allocation2 [shape = 'u8[16384]{0}', space=vmem, size = 0x4000, scoped, tag = 'output window, operand 0, single buffered']
    #allocation3 [shape = 's32[1]{0}', space=sflag, size = 0x4, scoped, tag = 'scoped memory for tpu_custom_call.1']
    %12 = vsyncpa [#allocation3], 0
    // Predicated region
    $region2: #{tpu_custom_call.1} parent=1 // pred_check
      _
    $region3: #{tpu_custom_call.1} parent=1 // pred_check_branch
      %14 = sbr.rel (0) target = $region5
    $region4: #{tpu_custom_call.1} parent=1 // pred_region
      _
    $region5: #{tpu_custom_call.1} parent=1 // pred_fallthru
      _
    // Predicated region
    $region6: #{tpu_custom_call.1} parent=1 // pred_check
      _
    $region7: #{tpu_custom_call.1} parent=1 // pred_check_branch
      %16 = sbr.rel (0) target = $region9
    $region8: #{tpu_custom_call.1} parent=1 // pred_region
      _
    $region9: #{tpu_custom_call.1} parent=1 // pred_fallthru
      _
    // Predicated region
    $region10: #{tpu_custom_call.1} parent=1 // pred_check
      _
    $region11: #{tpu_custom_call.1} parent=1 // pred_check_branch
      %18 = sbr.rel (0) target = $region13
    $region12: #{tpu_custom_call.1} parent=1 // pred_region
      _
    $region13: #{tpu_custom_call.1} parent=1 // pred_fallthru
      _
    // Predicated region
    $region14: #{tpu_custom_call.1} parent=1 // pred_check
      _
    $region15: #{tpu_custom_call.1} parent=1 // pred_check_branch
      %20 = sbr.rel (0) target = $region17
    $region16: #{tpu_custom_call.1} parent=1 // pred_region
      _
    $region17: #{tpu_custom_call.1} parent=1 // pred_fallthru
      _
    // Predicated region
    $region18: #{tpu_custom_call.1} parent=1 // pred_check
      _
    $region19: #{tpu_custom_call.1} parent=1 // pred_check_branch
      %22 = sbr.rel (0) target = $region21
    $region20: #{tpu_custom_call.1} parent=1 // pred_region
      _
    $region21: #{tpu_custom_call.1} parent=1 // pred_fallthru
      _
    // Predicated region
    $region22: #{tpu_custom_call.1} parent=1 // pred_check
      _
    $region23: #{tpu_custom_call.1} parent=1 // pred_check_branch
      %24 = sbr.rel (0) target = $region25
    $region24: #{tpu_custom_call.1} parent=1 // pred_region
      _
    $region25: #{tpu_custom_call.1} parent=1 // pred_fallthru
      _
    // Predicated region
    $region26: #{tpu_custom_call.1} parent=1 // pred_check
      _
    $region27: #{tpu_custom_call.1} parent=1 // pred_check_branch
      %26 = sbr.rel (0) target = $region29
    $region28: #{tpu_custom_call.1} parent=1 // pred_region
      _
    $region29: #{tpu_custom_call.1} parent=1 // pred_fallthru
      _
    %v27 = vld [vmem:[%s0] sm:$0xff]
    %v28 = vld [vmem:[%s0 + $0x8] sm:$0xff]
    %v29 = vld [vmem:[%s0 + $0x10] sm:$0xff]
    %v30 = vld [vmem:[%s0 + $0x18] sm:$0xff]
    %v31 = vld [vmem:[%s1] sm:$0xff]
    %v32 = vld [vmem:[%s1 + $0x8] sm:$0x3]
    %v33 = vld [vmem:[%s2] sm:$0x1]
    %vm38 = vcmask 1041408
    %v39 = vrot.slane %v27, 6
    %v40 = vrot.slane %v28, 6
    %v41 = vsel %vm38, %v39, %v40
    %v42 = vrot.slane %v29, 6
    %v43 = vrot.slane %v30, 6
    %v44 = vsel %vm38, %v42, %v43
    %v51 = vsel %vm38, 0.0, %v39
    %v52 = vsel %vm38, 0.0, %v42
    %v53 = vsel %vm38, %v40, 0.0
    %v54 = vsel %vm38, %v43, 0.0
    %vm59 = vcmask 1046528
    %v60 = vrot.slane %v51, 1
    %v61 = vrot.slane %v41, 1
    %v62 = vsel %vm59, %v60, %v61
    %v63 = vrot.slane %v53, 1
    %v64 = vsel %vm59, %v61, %v63
    %v65 = vrot.slane %v52, 1
    %v66 = vrot.slane %v44, 1
    %v67 = vsel %vm59, %v65, %v66
    %v68 = vrot.slane %v54, 1
    %v69 = vsel %vm59, %v66, %v68
    %70 = vrot.lane.b32.xlu0 %v62, 2
    %v71 = vpop.permute.xlu0 %70
    %72 = vrot.lane.b32.xlu0 %v64, 2
    %v73 = vpop.permute.xlu0 %72
    %74 = vrot.lane.b32.xlu0 %v67, 2
    %v75 = vpop.permute.xlu0 %74
    %76 = vrot.lane.b32.xlu0 %v69, 2
    %v77 = vpop.permute.xlu0 %76
    %vm82 = vcmask 1045504
    %v83 = vrot.slane %v51, 2
    %v84 = vrot.slane %v41, 2
    %v85 = vsel %vm82, %v83, %v84
    %v86 = vrot.slane %v53, 2
    %v87 = vsel %vm82, %v84, %v86
    %v88 = vrot.slane %v52, 2
    %v89 = vrot.slane %v44, 2
    %v90 = vsel %vm82, %v88, %v89
    %v91 = vrot.slane %v54, 2
    %v92 = vsel %vm82, %v89, %v91
    %93 = vrot.lane.b32.xlu0 %v85, 4
    %v94 = vpop.permute.xlu0 %93
    %95 = vrot.lane.b32.xlu0 %v87, 4
    %v96 = vpop.permute.xlu0 %95
    %97 = vrot.lane.b32.xlu0 %v90, 4
    %v98 = vpop.permute.xlu0 %97
    %99 = vrot.lane.b32.xlu0 %v92, 4
    %v100 = vpop.permute.xlu0 %99
    %vm105 = vcmask 1044480
    %v106 = vrot.slane %v51, 3
    %v107 = vrot.slane %v41, 3
    %v108 = vsel %vm105, %v106, %v107
    %v109 = vrot.slane %v53, 3
    %v110 = vsel %vm105, %v107, %v109
    %v111 = vrot.slane %v52, 3
    %v112 = vrot.slane %v44, 3
    %v113 = vsel %vm105, %v111, %v112
    %v114 = vrot.slane %v54, 3
    %v115 = vsel %vm105, %v112, %v114
    %116 = vrot.lane.b32.xlu0 %v108, 6
    %v117 = vpop.permute.xlu0 %116
    %118 = vrot.lane.b32.xlu0 %v110, 6
    %v119 = vpop.permute.xlu0 %118
    %120 = vrot.lane.b32.xlu0 %v113, 6
    %v121 = vpop.permute.xlu0 %120
    %122 = vrot.lane.b32.xlu0 %v115, 6
    %v123 = vpop.permute.xlu0 %122
    %vm128 = vcmask 1043456
    %v129 = vrot.slane %v51, 4
    %v130 = vrot.slane %v41, 4
    %v131 = vsel %vm128, %v129, %v130
    %v132 = vrot.slane %v53, 4
    %v133 = vsel %vm128, %v130, %v132
    %v134 = vrot.slane %v52, 4
    %v135 = vrot.slane %v44, 4
    %v136 = vsel %vm128, %v134, %v135
    %v137 = vrot.slane %v54, 4
    %v138 = vsel %vm128, %v135, %v137
    %139 = vrot.lane.b32.xlu0 %v131, 8
    %v140 = vpop.permute.xlu0 %139
    %141 = vrot.lane.b32.xlu0 %v133, 8
    %v142 = vpop.permute.xlu0 %141
    %143 = vrot.lane.b32.xlu0 %v136, 8
    %v144 = vpop.permute.xlu0 %143
    %145 = vrot.lane.b32.xlu0 %v138, 8
    %v146 = vpop.permute.xlu0 %145
    %vm151 = vcmask 15360
    %v152 = vsel %vm151, %v51, %v71
    %v153 = vsel %vm151, %v41, %v73
    %v154 = vsel %vm151, %v52, %v75
    %v155 = vsel %vm151, %v44, %v77
    %vm156 = vcmask 31744
    %v157 = vsel %vm156, %v152, %v94
    %v158 = vsel %vm156, %v153, %v96
    %v159 = vsel %vm156, %v154, %v98
    %v160 = vsel %vm156, %v155, %v100
    %vm161 = vcmask 48128
    %v162 = vsel %vm161, %v157, %v117
    %v163 = vsel %vm161, %v158, %v119
    %v164 = vsel %vm161, %v159, %v121
    %v165 = vsel %vm161, %v160, %v123
    %vm166 = vcmask 64512
    %v167 = vsel %vm166, %v162, %v140
    %v168 = vsel %vm166, %v163, %v142
    %v169 = vsel %vm166, %v164, %v144
    %v170 = vsel %vm166, %v165, %v146
    %v172 = vlaneseq
    %v173 = vshrl.u32 %v172, 7
    %v174 = vsub.s32 0, %v173
    %v175 = vrot.slane %v33, %v174
    %vm177 = vcmask 80896
    %v179 = vsel %vm177, %v167, 0
    %v182 = vsel %vm177, %v168, 0
    %v185 = vsel %vm177, %v169, 0
    %v188 = vsel %vm177, %v170, 0
    %v191 = vsel %vm38, %v32, 0
    %193 = vmatprep.subr.mxu0 0.0
    %194 = vmatpush1.msra.mxu0 0.0
    %195 = vmatprep.subr.mxu0 0.0
    %196 = vmatpush1.msra.mxu0 0.0
    %197 = vmatprep.subr.mxu0 0.0
    %198 = vmatpush1.msra.mxu0 0.0
    %199 = vmatprep.subr.mxu0 0.0
    %200 = vmatpush1.msra.mxu0 0.0
    %201 = vmatprep.subr.mxu0 0.0
    %202 = vmatpush1.msra.mxu0 0.0
    %203 = vmatprep.subr.mxu0 0.0
    %204 = vmatpush1.msra.mxu0 0.0
    %205 = vmatprep.subr.mxu0 0.0
    %206 = vmatpush1.msra.mxu0 0.0
    %207 = vmatprep.subr.mxu0 0.0
    %208 = vmatpush1.msra.mxu0 0.0
    %209 = vmatprep.subr.mxu0 0.0
    %210 = vmatpush1.msra.mxu0 0.0
    %211 = vmatprep.subr.mxu0 0.0
    %212 = vmatpush1.msra.mxu0 0.0
    %213 = vmatprep.subr.mxu0 0.0
    %214 = vmatpush1.msra.mxu0 0.0
    %215 = vmatprep.subr.mxu0 0.0
    %216 = vmatpush1.msra.mxu0 0.0
    %217 = vmatprep.subr.mxu0 0.0
    %218 = vmatpush1.msra.mxu0 0.0
    %219 = vmatprep.subr.mxu0 0.0
    %220 = vmatpush1.msra.mxu0 0.0
    %221 = vmatprep.subr.mxu0 0.0
    %222 = vmatpush1.msra.mxu0 %v191
    %223 = vmatprep.subr.mxu0 0.0
    %224 = vmatpush1.msra.mxu0 %v31
    %225 = vmatprep.subr.mxu0 0.0
    %226 = vmatpush2.msra.mxu0 0.0
    %227 = vmatprep.subr.mxu0 0.0
    %228 = vmatpush2.msra.mxu0 0.0
    %229 = vmatprep.subr.mxu0 0.0
    %230 = vmatpush2.msra.mxu0 0.0
    %231 = vmatprep.subr.mxu0 0.0
    %232 = vmatpush2.msra.mxu0 0.0
    %233 = vmatprep.subr.mxu0 0.0
    %234 = vmatpush2.msra.mxu0 0.0
    %235 = vmatprep.subr.mxu0 0.0
    %236 = vmatpush2.msra.mxu0 0.0
    %237 = vmatprep.subr.mxu0 0.0
    %238 = vmatpush2.msra.mxu0 0.0
    %239 = vmatprep.subr.mxu0 0.0
    %240 = vmatpush2.msra.mxu0 0.0
    %241 = vmatprep.subr.mxu0 0.0
    %242 = vmatpush2.msra.mxu0 0.0
    %243 = vmatprep.subr.mxu0 0.0
    %244 = vmatpush2.msra.mxu0 0.0
    %245 = vmatprep.subr.mxu0 0.0
    %246 = vmatpush2.msra.mxu0 0.0
    %247 = vmatprep.subr.mxu0 0.0
    %248 = vmatpush2.msra.mxu0 0.0
    %249 = vmatprep.subr.mxu0 0.0
    %250 = vmatpush2.msra.mxu0 0.0
    %251 = vmatprep.subr.mxu0 0.0
    %252 = vmatpush2.msra.mxu0 0.0
    %253 = vmatprep.subr.mxu0 0.0
    %254 = vmatpush2.msra.mxu0 0.0
    %255 = vmatprep.subr.mxu0 0.0
    %256 = vmatpush2.msra.mxu0 0.0
    %257 = vmatprep.mubr.f32.mxu0 0.0
    %258 = vmatmul.mubr.f32.gmra.mxu0 %v179
    %v259 = vpop.f32.mrf.mxu0
    %v260 = vadd.f32 %v175, %v259
    %v261 = vpop.f32.mrf.mxu0
    %262 = vmatprep.mubr.f32.mxu0 0.0
    %263 = vmatmul.mubr.f32.gmra.mxu0 %v182
    %v264 = vpop.f32.mrf.mxu0
    %v265 = vadd.f32 %v175, %v264
    %v266 = vpop.f32.mrf.mxu0
    %267 = vmatprep.mubr.f32.mxu0 0.0
    %268 = vmatmul.mubr.f32.gmra.mxu0 %v185
    %v269 = vpop.f32.mrf.mxu0
    %v270 = vadd.f32 %v175, %v269
    %v271 = vpop.f32.mrf.mxu0
    %272 = vmatprep.mubr.f32.mxu0 0.0
    %273 = vmatmul.mubr.f32.gmra.mxu0 %v188
    %v274 = vpop.f32.mrf.mxu0
    %v275 = vadd.f32 %v175, %v274
    %v276 = vpop.f32.mrf.mxu0
    %277 = vdwg.mxu0
    %v278 = vmax.f32 %v260, 0.0
    %v279 = vmax.f32 %v265, 0.0
    %v280 = vmax.f32 %v270, 0.0
    %v281 = vmax.f32 %v275, 0.0
    %v282 = vld [vmem:[%s3] sm:$0xff]
    %v283 = vld [vmem:[%s3 + $0x8] sm:$0xff]
    %v284 = vld [vmem:[%s3 + $0x10] sm:$0xff]
    %v285 = vld [vmem:[%s3 + $0x18] sm:$0xff]
    %v286 = vld [vmem:[%s3 + $0x20] sm:$0xff]
    %v287 = vld [vmem:[%s3 + $0x28] sm:$0xff]
    %v288 = vld [vmem:[%s3 + $0x30] sm:$0xff]
    %v289 = vld [vmem:[%s3 + $0x38] sm:$0xff]
    %v290 = vld [vmem:[%s3 + $0x40] sm:$0xff]
    %v291 = vld [vmem:[%s3 + $0x48] sm:$0xff]
    %v292 = vld [vmem:[%s4] sm:$0x1]
    %v297 = vrot.slane %v278, 6
    %v298 = vrot.slane %v279, 6
    %v299 = vsel %vm38, %v297, %v298
    %v300 = vrot.slane %v280, 6
    %v301 = vrot.slane %v281, 6
    %v302 = vsel %vm38, %v300, %v301
    %v309 = vsel %vm38, 0.0, %v297
    %v310 = vsel %vm38, 0.0, %v300
    %v311 = vsel %vm38, %v298, 0.0
    %v312 = vsel %vm38, %v301, 0.0
    %v317 = vrot.slane %v309, 1
    %v318 = vrot.slane %v299, 1
    %v319 = vsel %vm59, %v317, %v318
    %v320 = vrot.slane %v311, 1
    %v321 = vsel %vm59, %v318, %v320
    %v322 = vrot.slane %v310, 1
    %v323 = vrot.slane %v302, 1
    %v324 = vsel %vm59, %v322, %v323
    %v325 = vrot.slane %v312, 1
    %v326 = vsel %vm59, %v323, %v325
    %327 = vrot.lane.b32.xlu0 %v319, 16
    %v328 = vpop.permute.xlu0 %327
    %329 = vrot.lane.b32.xlu0 %v321, 16
    %v330 = vpop.permute.xlu0 %329
    %331 = vrot.lane.b32.xlu0 %v324, 16
    %v332 = vpop.permute.xlu0 %331
    %333 = vrot.lane.b32.xlu0 %v326, 16
    %v334 = vpop.permute.xlu0 %333
    %v339 = vrot.slane %v309, 2
    %v340 = vrot.slane %v299, 2
    %v341 = vsel %vm82, %v339, %v340
    %v342 = vrot.slane %v311, 2
    %v343 = vsel %vm82, %v340, %v342
    %v344 = vrot.slane %v310, 2
    %v345 = vrot.slane %v302, 2
    %v346 = vsel %vm82, %v344, %v345
    %v347 = vrot.slane %v312, 2
    %v348 = vsel %vm82, %v345, %v347
    %349 = vrot.lane.b32.xlu0 %v341, 32
    %v350 = vpop.permute.xlu0 %349
    %351 = vrot.lane.b32.xlu0 %v343, 32
    %v352 = vpop.permute.xlu0 %351
    %353 = vrot.lane.b32.xlu0 %v346, 32
    %v354 = vpop.permute.xlu0 %353
    %355 = vrot.lane.b32.xlu0 %v348, 32
    %v356 = vpop.permute.xlu0 %355
    %v361 = vrot.slane %v309, 3
    %v362 = vrot.slane %v299, 3
    %v363 = vsel %vm105, %v361, %v362
    %v364 = vrot.slane %v311, 3
    %v365 = vsel %vm105, %v362, %v364
    %v366 = vrot.slane %v310, 3
    %v367 = vrot.slane %v302, 3
    %v368 = vsel %vm105, %v366, %v367
    %v369 = vrot.slane %v312, 3
    %v370 = vsel %vm105, %v367, %v369
    %371 = vrot.lane.b32.xlu0 %v363, 48
    %v372 = vpop.permute.xlu0 %371
    %373 = vrot.lane.b32.xlu0 %v365, 48
    %v374 = vpop.permute.xlu0 %373
    %375 = vrot.lane.b32.xlu0 %v368, 48
    %v376 = vpop.permute.xlu0 %375
    %377 = vrot.lane.b32.xlu0 %v370, 48
    %v378 = vpop.permute.xlu0 %377
    %v383 = vrot.slane %v309, 4
    %v384 = vrot.slane %v299, 4
    %v385 = vsel %vm128, %v383, %v384
    %v386 = vrot.slane %v311, 4
    %v387 = vsel %vm128, %v384, %v386
    %v388 = vrot.slane %v310, 4
    %v389 = vrot.slane %v302, 4
    %v390 = vsel %vm128, %v388, %v389
    %v391 = vrot.slane %v312, 4
    %v392 = vsel %vm128, %v389, %v391
    %393 = vrot.lane.b32.xlu0 %v385, 64
    %v394 = vpop.permute.xlu0 %393
    %395 = vrot.lane.b32.xlu0 %v387, 64
    %v396 = vpop.permute.xlu0 %395
    %397 = vrot.lane.b32.xlu0 %v390, 64
    %v398 = vpop.permute.xlu0 %397
    %399 = vrot.lane.b32.xlu0 %v392, 64
    %v400 = vpop.permute.xlu0 %399
    %vm405 = vcmask 130048
    %v406 = vsel %vm405, %v309, %v328
    %v407 = vsel %vm405, %v299, %v330
    %v408 = vsel %vm405, %v310, %v332
    %v409 = vsel %vm405, %v302, %v334
    %vm410 = vcmask 261120
    %v411 = vsel %vm410, %v406, %v350
    %v412 = vsel %vm410, %v407, %v352
    %v413 = vsel %vm410, %v408, %v354
    %v414 = vsel %vm410, %v409, %v356
    %vm415 = vcmask 392192
    %v416 = vsel %vm415, %v411, %v372
    %v417 = vsel %vm415, %v412, %v374
    %v418 = vsel %vm415, %v413, %v376
    %v419 = vsel %vm415, %v414, %v378
    %vm420 = vcmask 523264
    %v421 = vsel %vm420, %v416, %v394
    %v422 = vsel %vm420, %v417, %v396
    %v423 = vsel %vm420, %v418, %v398
    %v424 = vsel %vm420, %v419, %v400
    %v426 = vlaneseq
    %v427 = vshrl.u32 %v426, 7
    %v428 = vsub.s32 0, %v427
    %v429 = vrot.slane %v292, %v428
    %vm431 = vcmask 654336
    %v433 = vsel %vm431, %v421, 0
    %v436 = vsel %vm431, %v422, 0
    %v439 = vsel %vm431, %v423, 0
    %v442 = vsel %vm431, %v424, 0
    %444 = vmatprep.subr.mxu0 0.0
    %445 = vmatpush1.msra.mxu0 0.0
    %446 = vmatprep.subr.mxu0 0.0
    %447 = vmatpush1.msra.mxu0 0.0
    %448 = vmatprep.subr.mxu0 0.0
    %449 = vmatpush1.msra.mxu0 0.0
    %450 = vmatprep.subr.mxu0 0.0
    %451 = vmatpush1.msra.mxu0 0.0
    %452 = vmatprep.subr.mxu0 0.0
    %453 = vmatpush1.msra.mxu0 0.0
    %454 = vmatprep.subr.mxu0 0.0
    %455 = vmatpush1.msra.mxu0 0.0
    %456 = vmatprep.subr.mxu0 0.0
    %457 = vmatpush1.msra.mxu0 %v291
    %458 = vmatprep.subr.mxu0 0.0
    %459 = vmatpush1.msra.mxu0 %v290
    %460 = vmatprep.subr.mxu0 0.0
    %461 = vmatpush1.msra.mxu0 %v289
    %462 = vmatprep.subr.mxu0 0.0
    %463 = vmatpush1.msra.mxu0 %v288
    %464 = vmatprep.subr.mxu0 0.0
    %465 = vmatpush1.msra.mxu0 %v287
    %466 = vmatprep.subr.mxu0 0.0
    %467 = vmatpush1.msra.mxu0 %v286
    %468 = vmatprep.subr.mxu0 0.0
    %469 = vmatpush1.msra.mxu0 %v285
    %470 = vmatprep.subr.mxu0 0.0
    %471 = vmatpush1.msra.mxu0 %v284
    %472 = vmatprep.subr.mxu0 0.0
    %473 = vmatpush1.msra.mxu0 %v283
    %474 = vmatprep.subr.mxu0 0.0
    %475 = vmatpush1.msra.mxu0 %v282
    %476 = vmatprep.subr.mxu0 0.0
    %477 = vmatpush2.msra.mxu0 0.0
    %478 = vmatprep.subr.mxu0 0.0
    %479 = vmatpush2.msra.mxu0 0.0
    %480 = vmatprep.subr.mxu0 0.0
    %481 = vmatpush2.msra.mxu0 0.0
    %482 = vmatprep.subr.mxu0 0.0
    %483 = vmatpush2.msra.mxu0 0.0
    %484 = vmatprep.subr.mxu0 0.0
    %485 = vmatpush2.msra.mxu0 0.0
    %486 = vmatprep.subr.mxu0 0.0
    %487 = vmatpush2.msra.mxu0 0.0
    %488 = vmatprep.subr.mxu0 0.0
    %489 = vmatpush2.msra.mxu0 0.0
    %490 = vmatprep.subr.mxu0 0.0
    %491 = vmatpush2.msra.mxu0 0.0
    %492 = vmatprep.subr.mxu0 0.0
    %493 = vmatpush2.msra.mxu0 0.0
    %494 = vmatprep.subr.mxu0 0.0
    %495 = vmatpush2.msra.mxu0 0.0
    %496 = vmatprep.subr.mxu0 0.0
    %497 = vmatpush2.msra.mxu0 0.0
    %498 = vmatprep.subr.mxu0 0.0
    %499 = vmatpush2.msra.mxu0 0.0
    %500 = vmatprep.subr.mxu0 0.0
    %501 = vmatpush2.msra.mxu0 0.0
    %502 = vmatprep.subr.mxu0 0.0
    %503 = vmatpush2.msra.mxu0 0.0
    %504 = vmatprep.subr.mxu0 0.0
    %505 = vmatpush2.msra.mxu0 0.0
    %506 = vmatprep.subr.mxu0 0.0
    %507 = vmatpush2.msra.mxu0 0.0
    %508 = vmatprep.mubr.f32.mxu0 0.0
    %509 = vmatmul.mubr.f32.gmra.mxu0 %v433
    %v510 = vpop.f32.mrf.mxu0
    %v511 = vadd.f32 %v429, %v510
    %v512 = vpop.f32.mrf.mxu0
    %513 = vmatprep.mubr.f32.mxu0 0.0
    %514 = vmatmul.mubr.f32.gmra.mxu0 %v436
    %v515 = vpop.f32.mrf.mxu0
    %v516 = vadd.f32 %v429, %v515
    %v517 = vpop.f32.mrf.mxu0
    %518 = vmatprep.mubr.f32.mxu0 0.0
    %519 = vmatmul.mubr.f32.gmra.mxu0 %v439
    %v520 = vpop.f32.mrf.mxu0
    %v521 = vadd.f32 %v429, %v520
    %v522 = vpop.f32.mrf.mxu0
    %523 = vmatprep.mubr.f32.mxu0 0.0
    %524 = vmatmul.mubr.f32.gmra.mxu0 %v442
    %v525 = vpop.f32.mrf.mxu0
    %v526 = vadd.f32 %v429, %v525
    %v527 = vpop.f32.mrf.mxu0
    %528 = vdwg.mxu0
    %v529 = vmax.f32 %v511, 0.0
    %v530 = vmax.f32 %v516, 0.0
    %v531 = vmax.f32 %v521, 0.0
    %v532 = vmax.f32 %v526, 0.0
    %v533 = vld [vmem:[%s5] sm:$0xff]
    %v534 = vld [vmem:[%s5 + $0x8] sm:$0xff]
    %v535 = vld [vmem:[%s5 + $0x10] sm:$0xff]
    %v536 = vld [vmem:[%s5 + $0x18] sm:$0xff]
    %v537 = vld [vmem:[%s5 + $0x20] sm:$0xff]
    %v538 = vld [vmem:[%s5 + $0x28] sm:$0xff]
    %v539 = vld [vmem:[%s5 + $0x30] sm:$0xff]
    %v540 = vld [vmem:[%s5 + $0x38] sm:$0xff]
    %v541 = vld [vmem:[%s5 + $0x40] sm:$0xff]
    %v542 = vld [vmem:[%s5 + $0x48] sm:$0xff]
    %v543 = vld [vmem:[%s5 + $0x50] sm:$0xff]
    %v544 = vld [vmem:[%s5 + $0x58] sm:$0xff]
    %v545 = vld [vmem:[%s5 + $0x60] sm:$0xff]
    %v546 = vld [vmem:[%s5 + $0x68] sm:$0xff]
    %v547 = vld [vmem:[%s5 + $0x70] sm:$0xff]
    %v548 = vld [vmem:[%s5 + $0x78] sm:$0xff]
    %v549 = vld [vmem:[%s5 + $0x80] sm:$0xff]
    %v550 = vld [vmem:[%s5 + $0x88] sm:$0xff]
    %v551 = vld [vmem:[%s5 + $0x90] sm:$0xff]
    %v552 = vld [vmem:[%s5 + $0x98] sm:$0xff]
    %v553 = vld [vmem:[%s6] sm:$0x1]
    %v558 = vrot.slane %v529, 6
    %v559 = vrot.slane %v530, 6
    %v560 = vsel %vm38, %v558, %v559
    %v561 = vrot.slane %v531, 6
    %v562 = vrot.slane %v532, 6
    %v563 = vsel %vm38, %v561, %v562
    %v570 = vsel %vm38, 0.0, %v558
    %v571 = vsel %vm38, 0.0, %v561
    %v572 = vsel %vm38, %v559, 0.0
    %v573 = vsel %vm38, %v562, 0.0
    %v578 = vrot.slane %v570, 1
    %v579 = vrot.slane %v560, 1
    %v580 = vsel %vm59, %v578, %v579
    %v581 = vrot.slane %v572, 1
    %v582 = vsel %vm59, %v579, %v581
    %v583 = vrot.slane %v571, 1
    %v584 = vrot.slane %v563, 1
    %v585 = vsel %vm59, %v583, %v584
    %v586 = vrot.slane %v573, 1
    %v587 = vsel %vm59, %v584, %v586
    %588 = vrot.lane.b32.xlu0 %v580, 32
    %v589 = vpop.permute.xlu0 %588
    %590 = vrot.lane.b32.xlu0 %v582, 32
    %v591 = vpop.permute.xlu0 %590
    %592 = vrot.lane.b32.xlu0 %v585, 32
    %v593 = vpop.permute.xlu0 %592
    %594 = vrot.lane.b32.xlu0 %v587, 32
    %v595 = vpop.permute.xlu0 %594
    %v600 = vrot.slane %v570, 2
    %v601 = vrot.slane %v560, 2
    %v602 = vsel %vm82, %v600, %v601
    %v603 = vrot.slane %v572, 2
    %v604 = vsel %vm82, %v601, %v603
    %v605 = vrot.slane %v571, 2
    %v606 = vrot.slane %v563, 2
    %v607 = vsel %vm82, %v605, %v606
    %v608 = vrot.slane %v573, 2
    %v609 = vsel %vm82, %v606, %v608
    %610 = vrot.lane.b32.xlu0 %v602, 64
    %v611 = vpop.permute.xlu0 %610
    %612 = vrot.lane.b32.xlu0 %v604, 64
    %v613 = vpop.permute.xlu0 %612
    %614 = vrot.lane.b32.xlu0 %v607, 64
    %v615 = vpop.permute.xlu0 %614
    %616 = vrot.lane.b32.xlu0 %v609, 64
    %v617 = vpop.permute.xlu0 %616
    %v622 = vrot.slane %v570, 3
    %v623 = vrot.slane %v560, 3
    %v624 = vsel %vm105, %v622, %v623
    %v625 = vrot.slane %v572, 3
    %v626 = vsel %vm105, %v623, %v625
    %v627 = vrot.slane %v571, 3
    %v628 = vrot.slane %v563, 3
    %v629 = vsel %vm105, %v627, %v628
    %v630 = vrot.slane %v573, 3
    %v631 = vsel %vm105, %v628, %v630
    %632 = vrot.lane.b32.xlu0 %v624, 96
    %v633 = vpop.permute.xlu0 %632
    %634 = vrot.lane.b32.xlu0 %v626, 96
    %v635 = vpop.permute.xlu0 %634
    %636 = vrot.lane.b32.xlu0 %v629, 96
    %v637 = vpop.permute.xlu0 %636
    %638 = vrot.lane.b32.xlu0 %v631, 96
    %v639 = vpop.permute.xlu0 %638
    %v644 = vrot.slane %v570, 4
    %v645 = vrot.slane %v560, 4
    %v646 = vsel %vm128, %v644, %v645
    %v647 = vrot.slane %v572, 4
    %v648 = vsel %vm128, %v645, %v647
    %v649 = vrot.slane %v571, 4
    %v650 = vrot.slane %v563, 4
    %v651 = vsel %vm128, %v649, %v650
    %v652 = vrot.slane %v573, 4
    %v653 = vsel %vm128, %v650, %v652
    %v654 = vsel %vm410, %v570, %v589
    %v655 = vsel %vm410, %v560, %v591
    %v656 = vsel %vm410, %v571, %v593
    %v657 = vsel %vm410, %v563, %v595
    %v658 = vsel %vm420, %v654, %v611
    %v659 = vsel %vm420, %v655, %v613
    %v660 = vsel %vm420, %v656, %v615
    %v661 = vsel %vm420, %v657, %v617
    %vm662 = vcmask 785408
    %v663 = vsel %vm662, %v658, %v633
    %v664 = vsel %vm662, %v659, %v635
    %v665 = vsel %vm662, %v660, %v637
    %v666 = vsel %vm662, %v661, %v639
    %v668 = vlaneseq
    %v669 = vshrl.u32 %v668, 7
    %v670 = vsub.s32 0, %v669
    %v671 = vrot.slane %v553, %v670
    %v673 = vsel %vm410, %v646, 0
    %v675 = vsel %vm410, %v648, 0
    %v677 = vsel %vm410, %v651, 0
    %v679 = vsel %vm410, %v653, 0
    %681 = vmatprep.subr.mxu0 0.0
    %682 = vmatpush1.msra.mxu0 %v548
    %683 = vmatprep.subr.mxu0 0.0
    %684 = vmatpush1.msra.mxu0 %v547
    %685 = vmatprep.subr.mxu0 0.0
    %686 = vmatpush1.msra.mxu0 %v546
    %687 = vmatprep.subr.mxu0 0.0
    %688 = vmatpush1.msra.mxu0 %v545
    %689 = vmatprep.subr.mxu0 0.0
    %690 = vmatpush1.msra.mxu0 %v544
    %691 = vmatprep.subr.mxu0 0.0
    %692 = vmatpush1.msra.mxu0 %v543
    %693 = vmatprep.subr.mxu0 0.0
    %694 = vmatpush1.msra.mxu0 %v542
    %695 = vmatprep.subr.mxu0 0.0
    %696 = vmatpush1.msra.mxu0 %v541
    %697 = vmatprep.subr.mxu0 0.0
    %698 = vmatpush1.msra.mxu0 %v540
    %699 = vmatprep.subr.mxu0 0.0
    %700 = vmatpush1.msra.mxu0 %v539
    %701 = vmatprep.subr.mxu0 0.0
    %702 = vmatpush1.msra.mxu0 %v538
    %703 = vmatprep.subr.mxu0 0.0
    %704 = vmatpush1.msra.mxu0 %v537
    %705 = vmatprep.subr.mxu0 0.0
    %706 = vmatpush1.msra.mxu0 %v536
    %707 = vmatprep.subr.mxu0 0.0
    %708 = vmatpush1.msra.mxu0 %v535
    %709 = vmatprep.subr.mxu0 0.0
    %710 = vmatpush1.msra.mxu0 %v534
    %711 = vmatprep.subr.mxu0 0.0
    %712 = vmatpush1.msra.mxu0 %v533
    %713 = vmatprep.subr.mxu0 0.0
    %714 = vmatpush2.msra.mxu0 0.0
    %715 = vmatprep.subr.mxu0 0.0
    %716 = vmatpush2.msra.mxu0 0.0
    %717 = vmatprep.subr.mxu0 0.0
    %718 = vmatpush2.msra.mxu0 0.0
    %719 = vmatprep.subr.mxu0 0.0
    %720 = vmatpush2.msra.mxu0 0.0
    %721 = vmatprep.subr.mxu0 0.0
    %722 = vmatpush2.msra.mxu0 0.0
    %723 = vmatprep.subr.mxu0 0.0
    %724 = vmatpush2.msra.mxu0 0.0
    %725 = vmatprep.subr.mxu0 0.0
    %726 = vmatpush2.msra.mxu0 0.0
    %727 = vmatprep.subr.mxu0 0.0
    %728 = vmatpush2.msra.mxu0 0.0
    %729 = vmatprep.subr.mxu0 0.0
    %730 = vmatpush2.msra.mxu0 0.0
    %731 = vmatprep.subr.mxu0 0.0
    %732 = vmatpush2.msra.mxu0 0.0
    %733 = vmatprep.subr.mxu0 0.0
    %734 = vmatpush2.msra.mxu0 0.0
    %735 = vmatprep.subr.mxu0 0.0
    %736 = vmatpush2.msra.mxu0 0.0
    %737 = vmatprep.subr.mxu0 0.0
    %738 = vmatpush2.msra.mxu0 %v552
    %739 = vmatprep.subr.mxu0 0.0
    %740 = vmatpush2.msra.mxu0 %v551
    %741 = vmatprep.subr.mxu0 0.0
    %742 = vmatpush2.msra.mxu0 %v550
    %743 = vmatprep.subr.mxu0 0.0
    %744 = vmatpush2.msra.mxu0 %v549
    %745 = vmatprep.mubr.f32.mxu0 %v673
    %746 = vmatmul.mubr.f32.gmra.mxu0 %v663
    %v747 = vpop.f32.mrf.mxu0
    %v748 = vadd.f32 %v671, %v747
    %v749 = vpop.f32.mrf.mxu0
    %750 = vmatprep.mubr.f32.mxu0 %v675
    %751 = vmatmul.mubr.f32.gmra.mxu0 %v664
    %v752 = vpop.f32.mrf.mxu0
    %v753 = vadd.f32 %v671, %v752
    %v754 = vpop.f32.mrf.mxu0
    %755 = vmatprep.mubr.f32.mxu0 %v677
    %756 = vmatmul.mubr.f32.gmra.mxu0 %v665
    %v757 = vpop.f32.mrf.mxu0
    %v758 = vadd.f32 %v671, %v757
    %v759 = vpop.f32.mrf.mxu0
    %760 = vmatprep.mubr.f32.mxu0 %v679
    %761 = vmatmul.mubr.f32.gmra.mxu0 %v666
    %v762 = vpop.f32.mrf.mxu0
    %v763 = vadd.f32 %v671, %v762
    %v764 = vpop.f32.mrf.mxu0
    %765 = vdwg.mxu0
    %v766 = vmax.f32 %v748, 0.0
    %v767 = vmax.f32 %v753, 0.0
    %v768 = vmax.f32 %v758, 0.0
    %v769 = vmax.f32 %v763, 0.0
    %770 = vst.msk [vmem:[#allocation2] sm:$0xff] %vm420, %v766
    %771 = vst.msk [vmem:[#allocation2 + $0x8] sm:$0xff] %vm420, %v767
    %772 = vst.msk [vmem:[#allocation2 + $0x10] sm:$0xff] %vm420, %v768
    %773 = vst.msk [vmem:[#allocation2 + $0x18] sm:$0xff] %vm420, %v769
    // Predicated region
    $region30: #{tpu_custom_call.1} parent=1 // pred_check
      _
    $region31: #{tpu_custom_call.1} parent=1 // pred_check_branch
      %775 = sbr.rel (0) target = $region33
    $region32: #{tpu_custom_call.1} parent=1 // pred_region
      %s777 = ssub.s32 512, 512
      %778 = vsyncadd [#allocation3], %s777
      %s779 = sshll.u32 [#allocation2], 4
      %s780 = int_to_ptr.vmem [resolvable:$true] %s779
      %785 = dma.vmem_to_hbm [thread:$0]  %s780, 512, %s7, [#allocation3], 128, 128, 8
    $region33: #{tpu_custom_call.1} parent=1 // pred_fallthru
      _
    // Predicated region
    $region34: #{tpu_custom_call.1} parent=1 // pred_check
      _
    $region35: #{tpu_custom_call.1} parent=1 // pred_check_branch
      %787 = sbr.rel (0) target = $region37
    $region36: #{tpu_custom_call.1} parent=1 // pred_region
      %788 = dma.done [#allocation3], 512
    $region37: #{tpu_custom_call.1} parent=1 // pred_fallthru
      _
    %789 = vsyncpa [#allocation3], 1

</llo_original>
